<compile_context>
chip_gen: v7x
topology: tpu7x:2x2x1
jax: 0.10.0
libtpu: 0.0.40
codegen_flags: <defaults>
</compile_context>

<pallas_src>
import functools

import jax
import jax.numpy as jnp
from jax.experimental import pallas as pl
from jax.experimental.pallas import tpu as pltpu


_LANE = 128
_VMEM_BUDGET_BYTES = 20 * 1024 * 1024          # per-step working-set target
_WEIGHT_STATIONARY_MAX_BYTES = 6 * 1024 * 1024  # resident-weight gate
_VMEM_LIMIT_BYTES = 32 * 1024 * 1024            # safe scoped limit on v5e/v6e/v7x


def _round_up(x, m):
    return -(-x // m) * m


def _sublane_multiple(dtype):
    # f32 tiles are (8,128); sub-32-bit dtypes pack more rows per sublane.
    return max(8, 32 // jnp.dtype(dtype).itemsize)


def _pick_tile(dim, candidates):
    """Largest candidate tile that divides `dim` exactly, else None."""
    for t in candidates:
        if dim % t == 0:
            return t
    return None


# ----------------------------------------------------------------------------
# Kernels
# ----------------------------------------------------------------------------

def _linear_kernel_wstationary(x_ref, wt_ref, b_ref, o_ref):
    # x_ref : (tm, in_dim)   VMEM (streamed)
    # wt_ref: (in_dim, n_pad) VMEM (constant block index -> resident)
    # b_ref : (1, n_pad)      VMEM (resident)
    # o_ref : (tm, n_pad)     VMEM
    acc = jnp.dot(x_ref[...], wt_ref[...], preferred_element_type=jnp.float32)
    o_ref[...] = (acc + b_ref[...].astype(jnp.float32)).astype(o_ref.dtype)


def _linear_kernel_ktiled(x_ref, wt_ref, b_ref, o_ref, acc_ref):
    # Classic M/N/K tiled matmul with f32 accumulator; bias folded into the
    # accumulator init (saves one full VALU pass in the epilogue).
    k = pl.program_id(2)

    @pl.when(k == 0)
    def _():
        acc_ref[...] = jnp.broadcast_to(
            b_ref[...].astype(jnp.float32), acc_ref.shape)

    acc_ref[...] += jnp.dot(x_ref[...], wt_ref[...],
                            preferred_element_type=jnp.float32)

    @pl.when(k == pl.num_programs(2) - 1)
    def _():
        o_ref[...] = acc_ref[...].astype(o_ref.dtype)


# ----------------------------------------------------------------------------
# Parameter preparation (one-time, NOT in the hot path)
# ----------------------------------------------------------------------------

def prepare_linear_norm_params(weight, bias=None):
    """Transpose the torch-layout (out_dim, in_dim) weight to (in_dim, n_pad)
    and zero-pad out_dim up to a multiple of 128 so the kernel's output
    stores are lane-dense.  Call once at parameter setup, not per forward."""
    out_dim, in_dim = weight.shape
    n_pad = _round_up(out_dim, _LANE)
    wt = weight.T
    if bias is None:
        bias = jnp.zeros((out_dim,), dtype=weight.dtype)
    if n_pad != out_dim:
        wt = jnp.pad(wt, ((0, 0), (0, n_pad - out_dim)))
        bias = jnp.pad(bias, (0, n_pad - out_dim))
    return wt, bias.reshape(1, n_pad), out_dim


# ----------------------------------------------------------------------------
# Forward (hot path)
# ----------------------------------------------------------------------------

def _wstationary_call(x2d, wt_pad, b_pad, m, in_dim, n_pad, elt, sub):
    # Largest M tile whose double-buffered x/out tiles plus the resident
    # weight/bias fit the VMEM budget.
    resident = 2 * in_dim * n_pad * elt + 2 * n_pad * elt
    tm = sub
    for cand in (1024, 512, 256, 128, 64, 32, 16, 8):
        if cand % sub:
            continue
        if 2 * cand * (in_dim + n_pad) * elt + resident <= _VMEM_BUDGET_BYTES:
            tm = cand
            break
    tm = min(tm, _round_up(m, sub))
    # v7x megacore: give the parallel M axis at least 2 tiles when there is
    # enough work to split across the two TensorCores.
    if pl.cdiv(m, tm) == 1 and m > 2 * sub:
        tm = _round_up(-(-m // 2), sub)
    grid_m = pl.cdiv(m, tm)

    cost = pl.CostEstimate(
        flops=2 * m * in_dim * n_pad,
        transcendentals=0,
        bytes_accessed=(m * in_dim + in_dim * n_pad + n_pad + m * n_pad) * elt,
    )
    return pl.pallas_call(
        _linear_kernel_wstationary,
        out_shape=jax.ShapeDtypeStruct((m, n_pad), x2d.dtype),
        grid_spec=pltpu.PrefetchScalarGridSpec(
            num_scalar_prefetch=0,
            grid=(grid_m,),
            in_specs=[
                pl.BlockSpec((tm, in_dim), lambda i: (i, 0)),
                pl.BlockSpec((in_dim, n_pad), lambda i: (0, 0)),  # resident W^T
                pl.BlockSpec((1, n_pad), lambda i: (0, 0)),       # resident bias
            ],
            out_specs=pl.BlockSpec((tm, n_pad), lambda i: (i, 0)),
        ),
        compiler_params=pltpu.CompilerParams(
            dimension_semantics=("parallel",),
            vmem_limit_bytes=_VMEM_LIMIT_BYTES),
        cost_estimate=cost,
    )(x2d, wt_pad, b_pad)


def _ktiled_call(x2d, wt_pad, b_pad, m, in_dim, n_pad, elt, sub):
    tm = 512 if m >= 512 else (256 if m >= 256 else _round_up(m, max(sub, 32)))
    # v6e/v7x MXU is 256 wide: prefer 256-aligned N/K tiles, fall back to 128.
    tn = _pick_tile(n_pad, (512, 256, 128))
    # Invariant: tk divides in_dim exactly or covers it fully -> K is never
    # padded, so ragged M-tail garbage never reaches the accumulator of a
    # valid row.
    tk = _pick_tile(in_dim, (1024, 512, 256, 128)) or in_dim

    grid = (pl.cdiv(m, tm), n_pad // tn, in_dim // tk)  # reduction (K) last
    cost = pl.CostEstimate(
        flops=2 * m * in_dim * n_pad,
        transcendentals=0,
        # Actual pipeline traffic: W re-read per M tile, x re-read per N tile.
        bytes_accessed=(grid[1] * m * in_dim
                        + grid[0] * in_dim * n_pad
                        + m * n_pad + n_pad) * elt,
    )
    return pl.pallas_call(
        _linear_kernel_ktiled,
        out_shape=jax.ShapeDtypeStruct((m, n_pad), x2d.dtype),
        grid_spec=pltpu.PrefetchScalarGridSpec(
            num_scalar_prefetch=0,
            grid=grid,
            in_specs=[
                pl.BlockSpec((tm, tk), lambda i, j, k: (i, k)),
                pl.BlockSpec((tk, tn), lambda i, j, k: (k, j)),
                pl.BlockSpec((1, tn), lambda i, j, k: (0, j)),
            ],
            out_specs=pl.BlockSpec((tm, tn), lambda i, j, k: (i, j)),
            scratch_shapes=[pltpu.VMEM((tm, tn), jnp.float32)],
        ),
        compiler_params=pltpu.CompilerParams(
            dimension_semantics=("parallel", "parallel", "arbitrary"),
            vmem_limit_bytes=_VMEM_LIMIT_BYTES),
        cost_estimate=cost,
    )(x2d, wt_pad, b_pad)


def linear_norm_apply(x, wt_pad, b_pad, out_dim):
    """y = x @ W^T + b using params from prepare_linear_norm_params.

    x:      (..., in_dim)
    wt_pad: (in_dim, n_pad)   pre-transposed, lane-padded weight
    b_pad:  (1, n_pad)        lane-padded bias
    """
    in_dim, n_pad = wt_pad.shape
    assert x.shape[-1] == in_dim
    lead_shape = x.shape[:-1]
    x2d = x.reshape(-1, in_dim)
    m = x2d.shape[0]
    if m == 0:  # empty leading dims: nothing to compute
        return jnp.zeros((*lead_shape, out_dim), dtype=x.dtype)

    elt = jnp.dtype(x.dtype).itemsize
    sub = _sublane_multiple(x.dtype)
    weight_bytes = in_dim * n_pad * jnp.dtype(wt_pad.dtype).itemsize

    if weight_bytes <= _WEIGHT_STATIONARY_MAX_BYTES:
        out = _wstationary_call(x2d, wt_pad, b_pad, m, in_dim, n_pad, elt, sub)
    else:
        out = _ktiled_call(x2d, wt_pad, b_pad, m, in_dim, n_pad, elt, sub)

    if n_pad != out_dim:
        # TODO(synk): for huge M on v7x, benchmark masked-store unpadded output
        # vs. this pad-then-slice (extra HBM pass over the output).
        out = out[:, :out_dim]
    return out.reshape(*lead_shape, out_dim)


def linear_norm_pallas(x, weight, bias=None):
    """Convenience entry point with torch-layout weight (out_dim, in_dim).
    Prefer prepare_linear_norm_params + linear_norm_apply so the transpose /
    padding glue runs once per parameter set, not once per forward call."""
    wt_pad, b_pad, out_dim = prepare_linear_norm_params(weight, bias)
    return linear_norm_apply(x, wt_pad, b_pad, out_dim)


def make_linear_norm_params(key, in_dim, out_dim, w_init_gain="linear",
                            dtype=jnp.float32):
    """Deterministic parameter init matching LinearNorm.__init__ semantics."""
    gain = 1.0  # torch.nn.init.calculate_gain('linear') == 1.0
    k_w, k_b = jax.random.split(key)
    # xavier_uniform_: U(-a, a), a = gain * sqrt(6 / (fan_in + fan_out))
    a = gain * (6.0 / (in_dim + out_dim)) ** 0.5
    weight = jax.random.uniform(k_w, (out_dim, in_dim), dtype=dtype,
                                minval=-a, maxval=a)
    # torch Linear default bias init: U(-1/sqrt(fan_in), 1/sqrt(fan_in))
    bb = 1.0 / (in_dim ** 0.5)
    bias = jax.random.uniform(k_b, (out_dim,), dtype=dtype,
                              minval=-bb, maxval=bb)
    return weight, bias


if __name__ == "__main__":
    key = jax.random.PRNGKey(0)
    k_x, k_p = jax.random.split(key)

    batch, seq, in_dim, out_dim = 2, 8, 32, 64
    x = jax.random.normal(k_x, (batch, seq, in_dim), dtype=jnp.float32)

    weight, bias = make_linear_norm_params(k_p, in_dim, out_dim)

    # One-time parameter glue (transpose + lane padding) hoisted out of the
    # per-call path; the jitted forward only contains the Pallas matmul.
    wt_pad, b_pad, out_d = prepare_linear_norm_params(weight, bias)
    fwd = jax.jit(functools.partial(linear_norm_apply, out_dim=out_d))

    y = jax.block_until_ready(fwd(x, wt_pad, b_pad))

    # Reference check (plain JAX) to make sure semantics match nn.Linear.
    y_ref = x @ weight.T + bias
    assert y.shape == (batch, seq, out_dim)
    assert jnp.allclose(y, y_ref, atol=1e-5, rtol=1e-5)

    print("KERNEL_OK")
</pallas_src>

<mosaic_0001>
module attributes {stable_mosaic.version = 11 : i64} {
  func.func @_linear_kernel_wstationary(%arg0: i32, %arg1: memref<16x32xf32, #tpu.memory_space<vmem>>, %arg2: memref<32x128xf32, #tpu.memory_space<vmem>>, %arg3: memref<1x128xf32, #tpu.memory_space<vmem>>, %arg4: memref<16x128xf32, #tpu.memory_space<vmem>>) attributes {dimension_semantics = [#tpu.dimension_semantics<parallel>], iteration_bounds = array<i64: 1>, scalar_prefetch = 0 : i64, scratch_operands = 0 : i64, tpu.core_type = #tpu.core_type<tc>, window_params = [{transform_indices = @transform_0, window_bounds = array<i64: 16, 32>}, {pipeline_mode = #tpu.pipeline_mode<synchronous>, transform_indices = @transform_1, window_bounds = array<i64: 32, 128>}, {pipeline_mode = #tpu.pipeline_mode<synchronous>, transform_indices = @transform_2, window_bounds = array<i64: 1, 128>}, {transform_indices = @transform_3, window_bounds = array<i64: 16, 128>}]} {
    %c0 = arith.constant 0 : index
    %c0_0 = arith.constant 0 : index
    %0 = vector.load %arg1[%c0, %c0_0] : memref<16x32xf32, #tpu.memory_space<vmem>>, vector<16x32xf32>
    %c0_1 = arith.constant 0 : index
    %c0_2 = arith.constant 0 : index
    %1 = vector.load %arg2[%c0_1, %c0_2] : memref<32x128xf32, #tpu.memory_space<vmem>>, vector<32x128xf32>
    %cst = arith.constant dense<0.000000e+00> : vector<16x128xf32>
    %2 = tpu.matmul %0, %1, %cst {dimension_numbers = #tpu.dot_dimension_numbers<[1], [0], [0], [1], [0, 0, 1, 1], [], []>} : vector<16x32xf32>, vector<32x128xf32>, vector<16x128xf32> -> vector<16x128xf32>
    %c0_3 = arith.constant 0 : index
    %c0_4 = arith.constant 0 : index
    %3 = vector.load %arg3[%c0_3, %c0_4] : memref<1x128xf32, #tpu.memory_space<vmem>>, vector<1x128xf32>
    %4 = vector.broadcast %3 : vector<1x128xf32> to vector<16x128xf32>
    %5 = arith.addf %2, %4 : vector<16x128xf32>
    %c0_5 = arith.constant 0 : index
    %c0_6 = arith.constant 0 : index
    %6 = vector.load %arg4[%c0_5, %c0_6] : memref<16x128xf32, #tpu.memory_space<vmem>>, vector<16x128xf32>
    tpu.vector_store %arg4[%c0_5, %c0_6], %5 {strides = array<i32>} : memref<16x128xf32, #tpu.memory_space<vmem>>, vector<16x128xf32>,
    return
  }
  func.func @transform_0(%arg0: i32) -> (i32, i32) {
    %c0_i32 = arith.constant 0 : i32
    %c0_i32_0 = arith.constant 0 : i32
    return %arg0, %c0_i32 : i32, i32
  }
  func.func @transform_1(%arg0: i32) -> (i32, i32) {
    %c0_i32 = arith.constant 0 : i32
    %c0_i32_0 = arith.constant 0 : i32
    %c0_i32_1 = arith.constant 0 : i32
    return %c0_i32, %c0_i32_0 : i32, i32
  }
  func.func @transform_2(%arg0: i32) -> (i32, i32) {
    %c0_i32 = arith.constant 0 : i32
    %c0_i32_0 = arith.constant 0 : i32
    %c0_i32_1 = arith.constant 0 : i32
    return %c0_i32, %c0_i32_0 : i32, i32
  }
  func.func @transform_3(%arg0: i32) -> (i32, i32) {
    %c0_i32 = arith.constant 0 : i32
    %c0_i32_0 = arith.constant 0 : i32
    return %arg0, %c0_i32 : i32, i32
  }
}

</mosaic_0001>

<llo_original>
// kernel: linear_norm_apply.1
$region0: #{linear_norm_apply.1}
  #allocation0 [shape = 'u32[]', space=smem, size = 0x4, offset = 0x4, fixed_abs, tag = 'smem constant byte address 0x4 - core index']
  #allocation1 [shape = 'u32[144,128]{1,0:T(1,128)}', space=vmem, size = 0x12000, scoped, tag = 'internal scratch']
  %s0 = inlined_call_operand.hbm [shape: f32[16,32], index: 0, kind: input, shape index: {}]
  %s1 = inlined_call_operand.hbm [shape: f32[32,128], index: 1, kind: input, shape index: {}]
  %s2 = inlined_call_operand.vmem [shape: f32[1,128], index: 2, kind: input, shape index: {}]
  %s3 = inlined_call_operand.vmem [shape: f32[16,128], index: 3, kind: output, shape index: {}]
  %s4 = sld [smem:[#allocation0]]
  $region30: #{linear_norm_apply.1} parent=0
    _
  %s6 = ssub.s32 1, %s4
  %s7 = scalar_select 0, %s6, %s4
  $region1: #{linear_norm_apply.1} parent=0
    #allocation2 [shape = 'u8[8192]{0}', space=vmem, size = 0x2000, scoped, tag = 'input window, operand 0, single buffered']
    #allocation3 [shape = 's32[1]{0}', space=sflag, size = 0x4, scoped, tag = 'scoped memory for linear_norm_apply.1']
    #allocation4 [shape = 'u8[16384]{0}', space=vmem, size = 0x4000, scoped, tag = 'input window, operand 1, single buffered']
    #allocation5 [shape = 's32[1]{0}', space=sflag, size = 0x4, scoped, tag = 'scoped memory for linear_norm_apply.1']
    %8 = vsyncpa [#allocation3], 0
    %9 = vsyncpa [#allocation5], 0
    // Predicated region
    $region2: #{linear_norm_apply.1} parent=1 // pred_check
      _
    $region3: #{linear_norm_apply.1} parent=1 // pred_check_branch
      %11 = sbr.rel (0) target = $region5
    $region4: #{linear_norm_apply.1} parent=1 // pred_region
      %s13 = ssub.s32 256, 256
      %14 = vsyncadd [#allocation3], %s13
      %s15 = sshll.u32 [#allocation2], 4
      %s16 = int_to_ptr.vmem [resolvable:$true] %s15
      %21 = dma.hbm_to_vmem [thread:$0]  %s0, 256, %s16, [#allocation3], 128, 128, 8
    $region5: #{linear_norm_apply.1} parent=1 // pred_fallthru
      _
    // Predicated region
    $region6: #{linear_norm_apply.1} parent=1 // pred_check
      _
    $region7: #{linear_norm_apply.1} parent=1 // pred_check_branch
      %23 = sbr.rel (0) target = $region9
    $region8: #{linear_norm_apply.1} parent=1 // pred_region
      %s25 = ssub.s32 512, 512
      %26 = vsyncadd [#allocation5], %s25
      %s27 = sshll.u32 [#allocation4], 4
      %s28 = int_to_ptr.vmem [resolvable:$true] %s27
      %33 = dma.hbm_to_vmem [thread:$0]  %s1, 512, %s28, [#allocation5], 128, 128, 8
    $region9: #{linear_norm_apply.1} parent=1 // pred_fallthru
      _
    // Predicated region
    $region10: #{linear_norm_apply.1} parent=1 // pred_check
      _
    $region11: #{linear_norm_apply.1} parent=1 // pred_check_branch
      %35 = sbr.rel (0) target = $region13
    $region12: #{linear_norm_apply.1} parent=1 // pred_region
      _
    $region13: #{linear_norm_apply.1} parent=1 // pred_fallthru
      _
    // Predicated region
    $region14: #{linear_norm_apply.1} parent=1 // pred_check
      _
    $region15: #{linear_norm_apply.1} parent=1 // pred_check_branch
      %37 = sbr.rel (0) target = $region17
    $region16: #{linear_norm_apply.1} parent=1 // pred_region
      %38 = dma.done [#allocation3], 256
    $region17: #{linear_norm_apply.1} parent=1 // pred_fallthru
      _
    // Predicated region
    $region18: #{linear_norm_apply.1} parent=1 // pred_check
      _
    $region19: #{linear_norm_apply.1} parent=1 // pred_check_branch
      %40 = sbr.rel (0) target = $region21
    $region20: #{linear_norm_apply.1} parent=1 // pred_region
      %41 = dma.done [#allocation5], 512
    $region21: #{linear_norm_apply.1} parent=1 // pred_fallthru
      _
    %v42 = vld [vmem:[#allocation2] sm:$0xff]
    %v43 = vld [vmem:[#allocation2 + $0x8] sm:$0xff]
    %v44 = vld [vmem:[#allocation4] sm:$0xff]
    %v45 = vld [vmem:[#allocation4 + $0x8] sm:$0xff]
    %v46 = vld [vmem:[#allocation4 + $0x10] sm:$0xff]
    %v47 = vld [vmem:[#allocation4 + $0x18] sm:$0xff]
    %v48 = vld [vmem:[%s2] sm:$0x1]
    %v50 = vlaneseq
    %v51 = vshrl.u32 %v50, 7
    %v52 = vsub.s32 0, %v51
    %v53 = vrot.slane %v48, %v52
    %vm55 = vcmask 261120
    %v57 = vsel %vm55, %v42, 0
    %v60 = vsel %vm55, %v43, 0
    %62 = vmatprep.subr.mxu0 0.0
    %63 = vmatpush1.msra.mxu0 %v44
    %64 = vmatprep.subr.mxu0 0.0
    %65 = vmatpush1.msra.mxu0 %v45
    %66 = vmatprep.subr.mxu0 0.0
    %67 = vmatpush1.msra.mxu0 %v46
    %68 = vmatprep.subr.mxu0 0.0
    %69 = vmatpush1.msra.mxu0 %v47
    %70 = vmatprep.subr.mxu0 0.0
    %71 = vmatpush1.msra.mxu0 0.0
    %72 = vmatprep.subr.mxu0 0.0
    %73 = vmatpush1.msra.mxu0 0.0
    %74 = vmatprep.subr.mxu0 0.0
    %75 = vmatpush1.msra.mxu0 0.0
    %76 = vmatprep.subr.mxu0 0.0
    %77 = vmatpush1.msra.mxu0 0.0
    %78 = vmatprep.subr.mxu0 0.0
    %79 = vmatpush1.msra.mxu0 0.0
    %80 = vmatprep.subr.mxu0 0.0
    %81 = vmatpush1.msra.mxu0 0.0
    %82 = vmatprep.subr.mxu0 0.0
    %83 = vmatpush1.msra.mxu0 0.0
    %84 = vmatprep.subr.mxu0 0.0
    %85 = vmatpush1.msra.mxu0 0.0
    %86 = vmatprep.subr.mxu0 0.0
    %87 = vmatpush1.msra.mxu0 0.0
    %88 = vmatprep.subr.mxu0 0.0
    %89 = vmatpush1.msra.mxu0 0.0
    %90 = vmatprep.subr.mxu0 0.0
    %91 = vmatpush1.msra.mxu0 0.0
    %92 = vmatprep.subr.mxu0 0.0
    %93 = vmatpush1.msra.mxu0 0.0
    %94 = vmatprep.subr.mxu0 0.0
    %95 = vmatpush1.msra.mxu0 0.0
    %96 = vmatprep.subr.mxu0 0.0
    %97 = vmatpush1.msra.mxu0 0.0
    %98 = vmatprep.subr.mxu0 0.0
    %99 = vmatpush1.msra.mxu0 0.0
    %100 = vmatprep.subr.mxu0 0.0
    %101 = vmatpush1.msra.mxu0 0.0
    %102 = vmatprep.subr.mxu0 0.0
    %103 = vmatpush1.msra.mxu0 0.0
    %104 = vmatprep.subr.mxu0 0.0
    %105 = vmatpush1.msra.mxu0 0.0
    %106 = vmatprep.subr.mxu0 0.0
    %107 = vmatpush1.msra.mxu0 0.0
    %108 = vmatprep.subr.mxu0 0.0
    %109 = vmatpush1.msra.mxu0 0.0
    %110 = vmatprep.subr.mxu0 0.0
    %111 = vmatpush1.msra.mxu0 0.0
    %112 = vmatprep.subr.mxu0 0.0
    %113 = vmatpush1.msra.mxu0 0.0
    %114 = vmatprep.subr.mxu0 0.0
    %115 = vmatpush1.msra.mxu0 0.0
    %116 = vmatprep.subr.mxu0 0.0
    %117 = vmatpush1.msra.mxu0 0.0
    %118 = vmatprep.subr.mxu0 0.0
    %119 = vmatpush1.msra.mxu0 0.0
    %120 = vmatprep.subr.mxu0 0.0
    %121 = vmatpush1.msra.mxu0 0.0
    %122 = vmatprep.subr.mxu0 0.0
    %123 = vmatpush1.msra.mxu0 0.0
    %124 = vmatprep.subr.mxu0 0.0
    %125 = vmatpush1.msra.mxu0 0.0
    %126 = vmatprep.mubr.f32.mxu0 0.0
    %127 = vmatmul.mubr.f32.gmra.mrb[0].mxu0 %v57
    %v128 = vpop.f32.mrb[0].mxu0
    %v129 = vadd.f32 %v53, %v128
    %v130 = vpop.f32.mrb[0].mxu0
    %131 = vmatprep.mubr.f32.mxu0 0.0
    %132 = vmatmul.mubr.f32.gmra.mrb[0].mxu0 %v60
    %v133 = vpop.f32.mrb[0].mxu0
    %v134 = vadd.f32 %v53, %v133
    %v135 = vpop.f32.mrb[0].mxu0
    %136 = vdwg.mxu0
    %137 = vst [vmem:[%s3] sm:$0xff] %v129
    %138 = vst [vmem:[%s3 + $0x8] sm:$0xff] %v134
    // Predicated region
    $region22: #{linear_norm_apply.1} parent=1 // pred_check
      _
    $region23: #{linear_norm_apply.1} parent=1 // pred_check_branch
      %140 = sbr.rel (0) target = $region25
    $region24: #{linear_norm_apply.1} parent=1 // pred_region
      _
    $region25: #{linear_norm_apply.1} parent=1 // pred_fallthru
      _
    // Predicated region
    $region26: #{linear_norm_apply.1} parent=1 // pred_check
      _
    $region27: #{linear_norm_apply.1} parent=1 // pred_check_branch
      %142 = sbr.rel (0) target = $region29
    $region28: #{linear_norm_apply.1} parent=1 // pred_region
      _
    $region29: #{linear_norm_apply.1} parent=1 // pred_fallthru
      _
    %143 = vsyncpa [#allocation3], 1
    %144 = vsyncpa [#allocation5], 1

</llo_original>
